<compile_context>
chip_gen: v7x
topology: tpu7x:2x2x1
jax: 0.10.0
libtpu: 0.0.40
codegen_flags: <defaults>
</compile_context>

<pallas_src>
import functools

import jax
import jax.numpy as jnp
from jax.experimental import pallas as pl
from jax.experimental.pallas import tpu as pltpu

MIB = 1024 * 1024


def _round_up(x: int, m: int) -> int:
    return ((x + m - 1) // m) * m


def _vmem_budget_bytes() -> int:
    """Generation-aware VMEM budget: physical capacity minus scratch headroom."""
    try:
        cap = int(pltpu.get_tpu_info().vmem_capacity_bytes)
    except Exception:
        cap = 64 * MIB  # conservative fallback (v7x per-core size)
    return max(cap - 16 * MIB, 32 * MIB)


def _residual_block_kernel(x_ref, w_ref, b_ref, o_ref, *, residual, neg_slope, tn):
    # x_ref: (TM, D_in), w_ref: (D_in, TN), b_ref: (1, TN), o_ref: (TM, TN)
    x = x_ref[...]
    xm = x if x.dtype == w_ref.dtype else x.astype(w_ref.dtype)
    y = jnp.dot(xm, w_ref[...], preferred_element_type=jnp.float32)
    y = y + b_ref[...].astype(jnp.float32)
    # LeakyReLU (PyTorch default negative_slope = 0.01)
    y = jnp.where(y >= 0, y, neg_slope * y)
    if residual:  # only possible when d_in == d_out
        if tn == x_ref.shape[1]:
            xr = x
        else:
            j = pl.program_id(1)
            start = pl.multiple_of(j * tn, tn)
            xr = x_ref[:, pl.ds(start, tn)]
        y = y + xr.astype(jnp.float32)
    o_ref[...] = y.astype(o_ref.dtype)


def _choose_tiles(n_rows, d_in, d_out, x_bytes, w_bytes, budget_bytes, weight_buffers):
    """Pick (TM, TN, num_j, weight_footprint, per_row_bytes)."""
    bias_bytes = 4
    tn = d_out
    num_j = 1
    w_foot = weight_buffers * (d_in * tn * w_bytes + tn * bias_bytes)
    if w_foot > budget_bytes // 2 and d_out % 128 == 0:
        # Column-tile the weight so the per-step slab stays bounded (TN | d_out).
        # TODO(synk): add K-tiling (+ f32 accumulator) when d_in alone is too big.
        per_col = 2 * (d_in * w_bytes + bias_bytes)  # column slices double-buffered
        tn = 128 * max(1, (budget_bytes // 2) // (128 * per_col))
        tn = min(tn, d_out)
        while d_out % tn:
            tn -= 128
        num_j = d_out // tn
        w_foot = per_col * tn
    avail = max(budget_bytes - w_foot, 1)
    # Double-buffered x and out tiles + in-kernel f32 temporaries.
    per_row = 2 * d_in * x_bytes + 2 * tn * 4 + (d_in + tn) * 4
    tm = 2048 if max(d_in, tn) <= 256 else 1024
    while tm > 128 and tm * per_row > avail:
        tm //= 2
    tm = min(tm, _round_up(max(n_rows, 1), 8))
    tm = max(tm, 8)
    return tm, tn, num_j, w_foot, per_row


def _forward(x2, w_p, b_p, *, residual, neg_slope, tm, tn, num_i, num_j,
             single_buffer_weight, vmem_limit, cost):
    n_pad, d_in = x2.shape
    d_out = w_p.shape[1]

    kernel = functools.partial(
        _residual_block_kernel, residual=residual, neg_slope=neg_slope, tn=tn)

    # Weight/bias block index is constant only when there is no column tiling;
    # in that case a single VMEM buffer suffices (halves their footprint).
    use_single = single_buffer_weight and num_j == 1
    if use_single:
        w_spec = pl.BlockSpec((d_in, tn), lambda i, j: (0, j),
                              pipeline_mode=pl.Buffered(1))
        b_spec = pl.BlockSpec((1, tn), lambda i, j: (0, j),
                              pipeline_mode=pl.Buffered(1))
    else:
        w_spec = pl.BlockSpec((d_in, tn), lambda i, j: (0, j))
        b_spec = pl.BlockSpec((1, tn), lambda i, j: (0, j))

    return pl.pallas_call(
        kernel,
        out_shape=jax.ShapeDtypeStruct((n_pad, d_out), x2.dtype),
        grid_spec=pltpu.PrefetchScalarGridSpec(
            num_scalar_prefetch=0,
            grid=(num_i, num_j),
            in_specs=[
                pl.BlockSpec((tm, d_in), lambda i, j: (i, 0)),
                w_spec,
                b_spec,
            ],
            out_specs=pl.BlockSpec((tm, tn), lambda i, j: (i, j)),
        ),
        compiler_params=pltpu.CompilerParams(
            dimension_semantics=("parallel", "parallel"),
            vmem_limit_bytes=vmem_limit,
        ),
        cost_estimate=cost,
    )(x2, w_p, b_p)


def residual_block(x, w, b, *, neg_slope=0.01, use_bf16_matmul=False):
    """y = leaky_relu(x @ w + b); if input_dim == output_dim: y = x + y.

    x: (..., D_in) float32
    w: (D_in, D_out) float32   (transposed PyTorch Linear weight)
    b: (D_out,) float32
    use_bf16_matmul: cast the weight (and x inside the kernel) to bf16 for the MXU
      matmul (f32 accumulate / bias / activation / residual). Off by default for
      bit-level f32 parity with the PyTorch module.
    """
    d_in, d_out = w.shape
    lead_shape = x.shape[:-1]
    n = 1
    for s in lead_shape:
        n *= s
    # Mirrors the module: residual iff input_dim == output_dim.
    residual = (d_in == d_out)

    w_p = w.astype(jnp.bfloat16) if use_bf16_matmul else w
    b_p = b.reshape(1, d_out)

    budget = _vmem_budget_bytes()
    x_bytes = jnp.dtype(x.dtype).itemsize
    w_bytes = jnp.dtype(w_p.dtype).itemsize

    def run(single_buffer_weight):
        weight_buffers = 1 if single_buffer_weight else 2
        tm, tn, num_j, w_foot, per_row = _choose_tiles(
            n, d_in, d_out, x_bytes, w_bytes, budget, weight_buffers)
        n_pad = _round_up(max(n, 1), tm)
        x2 = x.reshape(n, d_in)
        if n_pad != n:  # row padding only when needed; features never padded in HBM
            x2 = jnp.pad(x2, ((0, n_pad - n), (0, 0)))
        vmem_limit = int(min(budget, max(32 * MIB, w_foot + tm * per_row + 8 * MIB)))
        cost = pl.CostEstimate(
            flops=2 * n * d_in * d_out,
            transcendentals=0,
            bytes_accessed=(n * d_in * x_bytes + d_in * d_out * w_bytes
                            + d_out * 4 + n * d_out * x_bytes),
        )
        out = _forward(x2, w_p, b_p, residual=residual, neg_slope=neg_slope,
                       tm=tm, tn=tn, num_i=n_pad // tm, num_j=num_j,
                       single_buffer_weight=single_buffer_weight,
                       vmem_limit=vmem_limit, cost=cost)
        if n_pad != n:
            out = out[:n]
        return out

    try:
        out = run(True)
    except Exception:
        # pipeline_mode=pl.Buffered(1) not supported on this jax build: fall back to
        # default double buffering with 2x-weight VMEM accounting.
        out = run(False)

    return out.reshape(*lead_shape, d_out)


def init_params(key, input_dim, output_dim):
    """Deterministic init mimicking nn.Linear's default U(-1/sqrt(in), 1/sqrt(in))."""
    kw, kb = jax.random.split(key)
    bound = 1.0 / (input_dim ** 0.5)
    w = jax.random.uniform(
        kw, (input_dim, output_dim), jnp.float32, minval=-bound, maxval=bound
    )
    b = jax.random.uniform(
        kb, (output_dim,), jnp.float32, minval=-bound, maxval=bound
    )
    return w, b


if __name__ == "__main__":
    key = jax.random.PRNGKey(0)
    k_x, k_p = jax.random.split(key)

    batch, seq, hidden = 2, 8, 32
    input_dim = output_dim = hidden  # equal dims -> residual connection active

    x = jax.random.normal(k_x, (batch, seq, input_dim), jnp.float32)
    w, b = init_params(k_p, input_dim, output_dim)

    y = residual_block(x, w, b)
    y = jax.block_until_ready(y)

    # Pure-JAX reference check
    y_lin = x @ w + b
    y_ref = jnp.where(y_lin >= 0, y_lin, 0.01 * y_lin)
    y_ref = x + y_ref
    assert y.shape == (batch, seq, output_dim)
    assert jnp.allclose(y, y_ref, atol=1e-5, rtol=1e-5)

    print("KERNEL_OK")
</pallas_src>

<mosaic_0001>
module attributes {stable_mosaic.version = 11 : i64} {
  func.func @_residual_block_kernel(%arg0: i32, %arg1: i32, %arg2: memref<16x32xf32, #tpu.memory_space<vmem>>, %arg3: memref<32x32xf32, #tpu.memory_space<vmem>>, %arg4: memref<1x32xf32, #tpu.memory_space<vmem>>, %arg5: memref<16x32xf32, #tpu.memory_space<vmem>>) attributes {dimension_semantics = [#tpu.dimension_semantics<parallel>, #tpu.dimension_semantics<parallel>], iteration_bounds = array<i64: 1, 1>, scalar_prefetch = 0 : i64, scratch_operands = 0 : i64, tpu.core_type = #tpu.core_type<tc>, window_params = [{transform_indices = @transform_0, window_bounds = array<i64: 16, 32>}, {pipeline_mode = #tpu.pipeline_mode<synchronous>, transform_indices = @transform_1, window_bounds = array<i64: 32, 32>}, {pipeline_mode = #tpu.pipeline_mode<synchronous>, transform_indices = @transform_2, window_bounds = array<i64: 1, 32>}, {transform_indices = @transform_3, window_bounds = array<i64: 16, 32>}]} {
    %c0 = arith.constant 0 : index
    %c0_0 = arith.constant 0 : index
    %0 = vector.load %arg2[%c0, %c0_0] : memref<16x32xf32, #tpu.memory_space<vmem>>, vector<16x32xf32>
    %c0_1 = arith.constant 0 : index
    %c0_2 = arith.constant 0 : index
    %1 = vector.load %arg3[%c0_1, %c0_2] : memref<32x32xf32, #tpu.memory_space<vmem>>, vector<32x32xf32>
    %cst = arith.constant dense<0.000000e+00> : vector<16x32xf32>
    %2 = tpu.matmul %0, %1, %cst {dimension_numbers = #tpu.dot_dimension_numbers<[1], [0], [0], [1], [0, 0, 1, 1], [], []>} : vector<16x32xf32>, vector<32x32xf32>, vector<16x32xf32> -> vector<16x32xf32>
    %c0_3 = arith.constant 0 : index
    %c0_4 = arith.constant 0 : index
    %3 = vector.load %arg4[%c0_3, %c0_4] : memref<1x32xf32, #tpu.memory_space<vmem>>, vector<1x32xf32>
    %4 = vector.broadcast %3 : vector<1x32xf32> to vector<16x32xf32>
    %5 = arith.addf %2, %4 : vector<16x32xf32>
    %cst_5 = arith.constant 0.000000e+00 : f32
    %6 = vector.broadcast %cst_5 : f32 to vector<16x32xf32>
    %7 = arith.cmpf oge, %5, %6 : vector<16x32xf32>
    %cst_6 = arith.constant 0.00999999977 : f32
    %8 = vector.broadcast %cst_6 : f32 to vector<16x32xf32>
    %9 = arith.mulf %8, %5 : vector<16x32xf32>
    %10 = arith.select %7, %5, %9 : vector<16x32xi1>, vector<16x32xf32>
    %11 = arith.addf %10, %0 : vector<16x32xf32>
    %c0_7 = arith.constant 0 : index
    %c0_8 = arith.constant 0 : index
    %12 = vector.load %arg5[%c0_7, %c0_8] : memref<16x32xf32, #tpu.memory_space<vmem>>, vector<16x32xf32>
    tpu.vector_store %arg5[%c0_7, %c0_8], %11 {strides = array<i32>} : memref<16x32xf32, #tpu.memory_space<vmem>>, vector<16x32xf32>,
    return
  }
  func.func @transform_0(%arg0: i32, %arg1: i32) -> (i32, i32) {
    %c0_i32 = arith.constant 0 : i32
    %c0_i32_0 = arith.constant 0 : i32
    return %arg0, %c0_i32 : i32, i32
  }
  func.func @transform_1(%arg0: i32, %arg1: i32) -> (i32, i32) {
    %c0_i32 = arith.constant 0 : i32
    %c0_i32_0 = arith.constant 0 : i32
    return %c0_i32, %arg1 : i32, i32
  }
  func.func @transform_2(%arg0: i32, %arg1: i32) -> (i32, i32) {
    %c0_i32 = arith.constant 0 : i32
    %c0_i32_0 = arith.constant 0 : i32
    return %c0_i32, %arg1 : i32, i32
  }
  func.func @transform_3(%arg0: i32, %arg1: i32) -> (i32, i32) {
    %c0_i32 = arith.constant 0 : i32
    return %arg0, %arg1 : i32, i32
  }
}

module attributes {stable_mosaic.version = 11 : i64} {
  func.func @_residual_block_kernel(%arg0: i32, %arg1: i32, %arg2: memref<16x32xf32, #tpu.memory_space<vmem>>, %arg3: memref<32x32xf32, #tpu.memory_space<vmem>>, %arg4: memref<1x32xf32, #tpu.memory_space<vmem>>, %arg5: memref<16x32xf32, #tpu.memory_space<vmem>>) attributes {dimension_semantics = [#tpu.dimension_semantics<parallel>, #tpu.dimension_semantics<parallel>], iteration_bounds = array<i64: 1, 1>, scalar_prefetch = 0 : i64, scratch_operands = 0 : i64, tpu.core_type = #tpu.core_type<tc>, window_params = [{transform_indices = @transform_0, window_bounds = array<i64: 16, 32>}, {transform_indices = @transform_1, window_bounds = array<i64: 32, 32>}, {transform_indices = @transform_2, window_bounds = array<i64: 1, 32>}, {transform_indices = @transform_3, window_bounds = array<i64: 16, 32>}]} {
    %c0 = arith.constant 0 : index
    %c0_0 = arith.constant 0 : index
    %0 = vector.load %arg2[%c0, %c0_0] : memref<16x32xf32, #tpu.memory_space<vmem>>, vector<16x32xf32>
    %c0_1 = arith.constant 0 : index
    %c0_2 = arith.constant 0 : index
    %1 = vector.load %arg3[%c0_1, %c0_2] : memref<32x32xf32, #tpu.memory_space<vmem>>, vector<32x32xf32>
    %cst = arith.constant dense<0.000000e+00> : vector<16x32xf32>
    %2 = tpu.matmul %0, %1, %cst {dimension_numbers = #tpu.dot_dimension_numbers<[1], [0], [0], [1], [0, 0, 1, 1], [], []>} : vector<16x32xf32>, vector<32x32xf32>, vector<16x32xf32> -> vector<16x32xf32>
    %c0_3 = arith.constant 0 : index
    %c0_4 = arith.constant 0 : index
    %3 = vector.load %arg4[%c0_3, %c0_4] : memref<1x32xf32, #tpu.memory_space<vmem>>, vector<1x32xf32>
    %4 = vector.broadcast %3 : vector<1x32xf32> to vector<16x32xf32>
    %5 = arith.addf %2, %4 : vector<16x32xf32>
    %cst_5 = arith.constant 0.000000e+00 : f32
    %6 = vector.broadcast %cst_5 : f32 to vector<16x32xf32>
    %7 = arith.cmpf oge, %5, %6 : vector<16x32xf32>
    %cst_6 = arith.constant 0.00999999977 : f32
    %8 = vector.broadcast %cst_6 : f32 to vector<16x32xf32>
    %9 = arith.mulf %8, %5 : vector<16x32xf32>
    %10 = arith.select %7, %5, %9 : vector<16x32xi1>, vector<16x32xf32>
    %11 = arith.addf %10, %0 : vector<16x32xf32>
    %c0_7 = arith.constant 0 : index
    %c0_8 = arith.constant 0 : index
    %12 = vector.load %arg5[%c0_7, %c0_8] : memref<16x32xf32, #tpu.memory_space<vmem>>, vector<16x32xf32>
    tpu.vector_store %arg5[%c0_7, %c0_8], %11 {strides = array<i32>} : memref<16x32xf32, #tpu.memory_space<vmem>>, vector<16x32xf32>,
    return
  }
  func.func @transform_0(%arg0: i32, %arg1: i32) -> (i32, i32) {
    %c0_i32 = arith.constant 0 : i32
    %c0_i32_0 = arith.constant 0 : i32
    return %arg0, %c0_i32 : i32, i32
  }
  func.func @transform_1(%arg0: i32, %arg1: i32) -> (i32, i32) {
    %c0_i32 = arith.constant 0 : i32
    %c0_i32_0 = arith.constant 0 : i32
    return %c0_i32, %arg1 : i32, i32
  }
  func.func @transform_2(%arg0: i32, %arg1: i32) -> (i32, i32) {
    %c0_i32 = arith.constant 0 : i32
    %c0_i32_0 = arith.constant 0 : i32
    return %c0_i32, %arg1 : i32, i32
  }
  func.func @transform_3(%arg0: i32, %arg1: i32) -> (i32, i32) {
    %c0_i32 = arith.constant 0 : i32
    return %arg0, %arg1 : i32, i32
  }
}

</mosaic_0001>

<llo_original>
// kernel: tpu_custom_call.1
$region0: #{tpu_custom_call.1}
  #allocation0 [shape = 'u32[]', space=smem, size = 0x4, offset = 0x4, fixed_abs, tag = 'smem constant byte address 0x4 - core index']
  #allocation1 [shape = 'u32[144,128]{1,0:T(1,128)}', space=vmem, size = 0x12000, scoped, tag = 'internal scratch']
  %s0 = inlined_call_operand.hbm [shape: f32[16,32], index: 0, kind: input, shape index: {}]
  %s1 = inlined_call_operand.hbm [shape: f32[32,32], index: 1, kind: input, shape index: {}]
  %s2 = inlined_call_operand.vmem [shape: f32[1,32], index: 2, kind: input, shape index: {}]
  %s3 = inlined_call_operand.hbm [shape: f32[16,32], index: 3, kind: output, shape index: {}]
  %s4 = sld [smem:[#allocation0]]
  $region30: #{tpu_custom_call.1} parent=0
    _
  %s6 = ssub.s32 1, %s4
  %s7 = scalar_select 0, %s6, %s4
  $region1: #{tpu_custom_call.1} parent=0
    #allocation2 [shape = 'u8[8192]{0}', space=vmem, size = 0x2000, scoped, tag = 'input window, operand 0, single buffered']
    #allocation3 [shape = 's32[1]{0}', space=sflag, size = 0x4, scoped, tag = 'scoped memory for tpu_custom_call.1']
    #allocation4 [shape = 's32[1]{0}', space=sflag, size = 0x4, scoped, tag = 'scoped memory for tpu_custom_call.1']
    #allocation5 [shape = 'u8[16384]{0}', space=vmem, size = 0x4000, scoped, tag = 'input window, operand 1, single buffered']
    #allocation6 [shape = 's32[1]{0}', space=sflag, size = 0x4, scoped, tag = 'scoped memory for tpu_custom_call.1']
    #allocation7 [shape = 'u8[8192]{0}', space=vmem, size = 0x2000, scoped, tag = 'output window, operand 0, single buffered']
    %8 = vsyncpa [#allocation3], 0
    %9 = vsyncpa [#allocation6], 0
    %10 = vsyncpa [#allocation4], 0
    // Predicated region
    $region2: #{tpu_custom_call.1} parent=1 // pred_check
      _
    $region3: #{tpu_custom_call.1} parent=1 // pred_check_branch
      %12 = sbr.rel (0) target = $region5
    $region4: #{tpu_custom_call.1} parent=1 // pred_region
      %s14 = ssub.s32 256, 256
      %15 = vsyncadd [#allocation3], %s14
      %s16 = sshll.u32 [#allocation2], 4
      %s17 = int_to_ptr.vmem [resolvable:$true] %s16
      %22 = dma.hbm_to_vmem [thread:$0]  %s0, 256, %s17, [#allocation3], 128, 128, 8
    $region5: #{tpu_custom_call.1} parent=1 // pred_fallthru
      _
    // Predicated region
    $region6: #{tpu_custom_call.1} parent=1 // pred_check
      _
    $region7: #{tpu_custom_call.1} parent=1 // pred_check_branch
      %24 = sbr.rel (0) target = $region9
    $region8: #{tpu_custom_call.1} parent=1 // pred_region
      %s26 = ssub.s32 512, 512
      %27 = vsyncadd [#allocation6], %s26
      %s28 = sshll.u32 [#allocation5], 4
      %s29 = int_to_ptr.vmem [resolvable:$true] %s28
      %34 = dma.hbm_to_vmem [thread:$0]  %s1, 512, %s29, [#allocation6], 128, 128, 8
    $region9: #{tpu_custom_call.1} parent=1 // pred_fallthru
      _
    // Predicated region
    $region10: #{tpu_custom_call.1} parent=1 // pred_check
      _
    $region11: #{tpu_custom_call.1} parent=1 // pred_check_branch
      %36 = sbr.rel (0) target = $region13
    $region12: #{tpu_custom_call.1} parent=1 // pred_region
      _
    $region13: #{tpu_custom_call.1} parent=1 // pred_fallthru
      _
    // Predicated region
    $region14: #{tpu_custom_call.1} parent=1 // pred_check
      _
    $region15: #{tpu_custom_call.1} parent=1 // pred_check_branch
      %38 = sbr.rel (0) target = $region17
    $region16: #{tpu_custom_call.1} parent=1 // pred_region
      %39 = dma.done [#allocation3], 256
    $region17: #{tpu_custom_call.1} parent=1 // pred_fallthru
      _
    // Predicated region
    $region18: #{tpu_custom_call.1} parent=1 // pred_check
      _
    $region19: #{tpu_custom_call.1} parent=1 // pred_check_branch
      %41 = sbr.rel (0) target = $region21
    $region20: #{tpu_custom_call.1} parent=1 // pred_region
      %42 = dma.done [#allocation6], 512
    $region21: #{tpu_custom_call.1} parent=1 // pred_fallthru
      _
    %v43 = vld [vmem:[#allocation2] sm:$0xff]
    %v44 = vld [vmem:[#allocation2 + $0x8] sm:$0xff]
    %v45 = vld [vmem:[#allocation5] sm:$0xff]
    %v46 = vld [vmem:[#allocation5 + $0x8] sm:$0xff]
    %v47 = vld [vmem:[#allocation5 + $0x10] sm:$0xff]
    %v48 = vld [vmem:[#allocation5 + $0x18] sm:$0xff]
    %v49 = vld [vmem:[%s2] sm:$0x1]
    %v51 = vlaneseq
    %v52 = vshrl.u32 %v51, 7
    %v53 = vsub.s32 0, %v52
    %v54 = vrot.slane %v49, %v53
    %vm56 = vcmask 261120
    %v58 = vsel %vm56, %v43, 0
    %v61 = vsel %vm56, %v44, 0
    %63 = vmatprep.subr.mxu0 0.0
    %64 = vmatpush1.msra.mxu0 %v45
    %65 = vmatprep.subr.mxu0 0.0
    %66 = vmatpush1.msra.mxu0 %v46
    %67 = vmatprep.subr.mxu0 0.0
    %68 = vmatpush1.msra.mxu0 %v47
    %69 = vmatprep.subr.mxu0 0.0
    %70 = vmatpush1.msra.mxu0 %v48
    %71 = vmatprep.subr.mxu0 0.0
    %72 = vmatpush1.msra.mxu0 0.0
    %73 = vmatprep.subr.mxu0 0.0
    %74 = vmatpush1.msra.mxu0 0.0
    %75 = vmatprep.subr.mxu0 0.0
    %76 = vmatpush1.msra.mxu0 0.0
    %77 = vmatprep.subr.mxu0 0.0
    %78 = vmatpush1.msra.mxu0 0.0
    %79 = vmatprep.subr.mxu0 0.0
    %80 = vmatpush1.msra.mxu0 0.0
    %81 = vmatprep.subr.mxu0 0.0
    %82 = vmatpush1.msra.mxu0 0.0
    %83 = vmatprep.subr.mxu0 0.0
    %84 = vmatpush1.msra.mxu0 0.0
    %85 = vmatprep.subr.mxu0 0.0
    %86 = vmatpush1.msra.mxu0 0.0
    %87 = vmatprep.subr.mxu0 0.0
    %88 = vmatpush1.msra.mxu0 0.0
    %89 = vmatprep.subr.mxu0 0.0
    %90 = vmatpush1.msra.mxu0 0.0
    %91 = vmatprep.subr.mxu0 0.0
    %92 = vmatpush1.msra.mxu0 0.0
    %93 = vmatprep.subr.mxu0 0.0
    %94 = vmatpush1.msra.mxu0 0.0
    %95 = vmatprep.subr.mxu0 0.0
    %96 = vmatpush1.msra.mxu0 0.0
    %97 = vmatprep.subr.mxu0 0.0
    %98 = vmatpush1.msra.mxu0 0.0
    %99 = vmatprep.subr.mxu0 0.0
    %100 = vmatpush1.msra.mxu0 0.0
    %101 = vmatprep.subr.mxu0 0.0
    %102 = vmatpush1.msra.mxu0 0.0
    %103 = vmatprep.subr.mxu0 0.0
    %104 = vmatpush1.msra.mxu0 0.0
    %105 = vmatprep.subr.mxu0 0.0
    %106 = vmatpush1.msra.mxu0 0.0
    %107 = vmatprep.subr.mxu0 0.0
    %108 = vmatpush1.msra.mxu0 0.0
    %109 = vmatprep.subr.mxu0 0.0
    %110 = vmatpush1.msra.mxu0 0.0
    %111 = vmatprep.subr.mxu0 0.0
    %112 = vmatpush1.msra.mxu0 0.0
    %113 = vmatprep.subr.mxu0 0.0
    %114 = vmatpush1.msra.mxu0 0.0
    %115 = vmatprep.subr.mxu0 0.0
    %116 = vmatpush1.msra.mxu0 0.0
    %117 = vmatprep.subr.mxu0 0.0
    %118 = vmatpush1.msra.mxu0 0.0
    %119 = vmatprep.subr.mxu0 0.0
    %120 = vmatpush1.msra.mxu0 0.0
    %121 = vmatprep.subr.mxu0 0.0
    %122 = vmatpush1.msra.mxu0 0.0
    %123 = vmatprep.subr.mxu0 0.0
    %124 = vmatpush1.msra.mxu0 0.0
    %125 = vmatprep.subr.mxu0 0.0
    %126 = vmatpush1.msra.mxu0 0.0
    %127 = vmatprep.mubr.f32.mxu0 0.0
    %128 = vmatmul.mubr.f32.gmra.mrb[0].mxu0 %v58
    %v129 = vpop.f32.mrb[0].mxu0
    %v130 = vadd.f32 %v54, %v129
    %v131 = vpop.f32.mrb[0].mxu0
    %132 = vmatprep.mubr.f32.mxu0 0.0
    %133 = vmatmul.mubr.f32.gmra.mrb[0].mxu0 %v61
    %v134 = vpop.f32.mrb[0].mxu0
    %v135 = vadd.f32 %v54, %v134
    %v136 = vpop.f32.mrb[0].mxu0
    %137 = vdwg.mxu0
    %vm138 = vcmp.ge.f32.partialorder %v130, 0.0
    %vm139 = vcmp.ge.f32.partialorder %v135, 0.0
    %v140 = vmul.f32 %v130, 0.01
    %v141 = vmul.f32 %v135, 0.01
    %v142 = vsel %vm138, %v130, %v140
    %v143 = vsel %vm139, %v135, %v141
    %v144 = vadd.f32 %v142, %v43
    %v145 = vadd.f32 %v143, %v44
    %146 = vst.msk [vmem:[#allocation7] sm:$0xff] %vm56, %v144
    %147 = vst.msk [vmem:[#allocation7 + $0x8] sm:$0xff] %vm56, %v145
    // Predicated region
    $region22: #{tpu_custom_call.1} parent=1 // pred_check
      _
    $region23: #{tpu_custom_call.1} parent=1 // pred_check_branch
      %149 = sbr.rel (0) target = $region25
    $region24: #{tpu_custom_call.1} parent=1 // pred_region
      %s151 = ssub.s32 256, 256
      %152 = vsyncadd [#allocation4], %s151
      %s153 = sshll.u32 [#allocation7], 4
      %s154 = int_to_ptr.vmem [resolvable:$true] %s153
      %159 = dma.vmem_to_hbm [thread:$0]  %s154, 256, %s3, [#allocation4], 128, 128, 8
    $region25: #{tpu_custom_call.1} parent=1 // pred_fallthru
      _
    // Predicated region
    $region26: #{tpu_custom_call.1} parent=1 // pred_check
      _
    $region27: #{tpu_custom_call.1} parent=1 // pred_check_branch
      %161 = sbr.rel (0) target = $region29
    $region28: #{tpu_custom_call.1} parent=1 // pred_region
      %162 = dma.done [#allocation4], 256
    $region29: #{tpu_custom_call.1} parent=1 // pred_fallthru
      _
    %163 = vsyncpa [#allocation3], 1
    %164 = vsyncpa [#allocation6], 1
    %165 = vsyncpa [#allocation4], 1

// kernel: tpu_custom_call.1
$region0: #{tpu_custom_call.1}
  #allocation0 [shape = 'u32[]', space=smem, size = 0x4, offset = 0x4, fixed_abs, tag = 'smem constant byte address 0x4 - core index']
  #allocation1 [shape = 'u32[144,128]{1,0:T(1,128)}', space=vmem, size = 0x12000, scoped, tag = 'internal scratch']
  %s0 = inlined_call_operand.hbm [shape: f32[16,32], index: 0, kind: input, shape index: {}]
  %s1 = inlined_call_operand.hbm [shape: f32[32,32], index: 1, kind: input, shape index: {}]
  %s2 = inlined_call_operand.vmem [shape: f32[1,32], index: 2, kind: input, shape index: {}]
  %s3 = inlined_call_operand.hbm [shape: f32[16,32], index: 3, kind: output, shape index: {}]
  %s4 = sld [smem:[#allocation0]]
  $region30: #{tpu_custom_call.1} parent=0
    _
  %s6 = ssub.s32 1, %s4
  %s7 = scalar_select 0, %s6, %s4
  $region1: #{tpu_custom_call.1} parent=0
    #allocation2 [shape = 'u8[8192]{0}', space=vmem, size = 0x2000, scoped, tag = 'input window, operand 0, single buffered']
    #allocation3 [shape = 's32[1]{0}', space=sflag, size = 0x4, scoped, tag = 'scoped memory for tpu_custom_call.1']
    #allocation4 [shape = 's32[1]{0}', space=sflag, size = 0x4, scoped, tag = 'scoped memory for tpu_custom_call.1']
    #allocation5 [shape = 'u8[16384]{0}', space=vmem, size = 0x4000, scoped, tag = 'input window, operand 1, single buffered']
    #allocation6 [shape = 's32[1]{0}', space=sflag, size = 0x4, scoped, tag = 'scoped memory for tpu_custom_call.1']
    #allocation7 [shape = 'u8[8192]{0}', space=vmem, size = 0x2000, scoped, tag = 'output window, operand 0, single buffered']
    %8 = vsyncpa [#allocation3], 0
    %9 = vsyncpa [#allocation6], 0
    %10 = vsyncpa [#allocation4], 0
    // Predicated region
    $region2: #{tpu_custom_call.1} parent=1 // pred_check
      _
    $region3: #{tpu_custom_call.1} parent=1 // pred_check_branch
      %12 = sbr.rel (0) target = $region5
    $region4: #{tpu_custom_call.1} parent=1 // pred_region
      %s14 = ssub.s32 256, 256
      %15 = vsyncadd [#allocation3], %s14
      %s16 = sshll.u32 [#allocation2], 4
      %s17 = int_to_ptr.vmem [resolvable:$true] %s16
      %22 = dma.hbm_to_vmem [thread:$0]  %s0, 256, %s17, [#allocation3], 128, 128, 8
    $region5: #{tpu_custom_call.1} parent=1 // pred_fallthru
      _
    // Predicated region
    $region6: #{tpu_custom_call.1} parent=1 // pred_check
      _
    $region7: #{tpu_custom_call.1} parent=1 // pred_check_branch
      %24 = sbr.rel (0) target = $region9
    $region8: #{tpu_custom_call.1} parent=1 // pred_region
      %s26 = ssub.s32 512, 512
      %27 = vsyncadd [#allocation6], %s26
      %s28 = sshll.u32 [#allocation5], 4
      %s29 = int_to_ptr.vmem [resolvable:$true] %s28
      %34 = dma.hbm_to_vmem [thread:$0]  %s1, 512, %s29, [#allocation6], 128, 128, 8
    $region9: #{tpu_custom_call.1} parent=1 // pred_fallthru
      _
    // Predicated region
    $region10: #{tpu_custom_call.1} parent=1 // pred_check
      _
    $region11: #{tpu_custom_call.1} parent=1 // pred_check_branch
      %36 = sbr.rel (0) target = $region13
    $region12: #{tpu_custom_call.1} parent=1 // pred_region
      _
    $region13: #{tpu_custom_call.1} parent=1 // pred_fallthru
      _
    // Predicated region
    $region14: #{tpu_custom_call.1} parent=1 // pred_check
      _
    $region15: #{tpu_custom_call.1} parent=1 // pred_check_branch
      %38 = sbr.rel (0) target = $region17
    $region16: #{tpu_custom_call.1} parent=1 // pred_region
      %39 = dma.done [#allocation3], 256
    $region17: #{tpu_custom_call.1} parent=1 // pred_fallthru
      _
    // Predicated region
    $region18: #{tpu_custom_call.1} parent=1 // pred_check
      _
    $region19: #{tpu_custom_call.1} parent=1 // pred_check_branch
      %41 = sbr.rel (0) target = $region21
    $region20: #{tpu_custom_call.1} parent=1 // pred_region
      %42 = dma.done [#allocation6], 512
    $region21: #{tpu_custom_call.1} parent=1 // pred_fallthru
      _
    %v43 = vld [vmem:[#allocation2] sm:$0xff]
    %v44 = vld [vmem:[#allocation2 + $0x8] sm:$0xff]
    %v45 = vld [vmem:[#allocation5] sm:$0xff]
    %v46 = vld [vmem:[#allocation5 + $0x8] sm:$0xff]
    %v47 = vld [vmem:[#allocation5 + $0x10] sm:$0xff]
    %v48 = vld [vmem:[#allocation5 + $0x18] sm:$0xff]
    %v49 = vld [vmem:[%s2] sm:$0x1]
    %v51 = vlaneseq
    %v52 = vshrl.u32 %v51, 7
    %v53 = vsub.s32 0, %v52
    %v54 = vrot.slane %v49, %v53
    %vm56 = vcmask 261120
    %v58 = vsel %vm56, %v43, 0
    %v61 = vsel %vm56, %v44, 0
    %63 = vmatprep.subr.mxu0 0.0
    %64 = vmatpush1.msra.mxu0 %v45
    %65 = vmatprep.subr.mxu0 0.0
    %66 = vmatpush1.msra.mxu0 %v46
    %67 = vmatprep.subr.mxu0 0.0
    %68 = vmatpush1.msra.mxu0 %v47
    %69 = vmatprep.subr.mxu0 0.0
    %70 = vmatpush1.msra.mxu0 %v48
    %71 = vmatprep.subr.mxu0 0.0
    %72 = vmatpush1.msra.mxu0 0.0
    %73 = vmatprep.subr.mxu0 0.0
    %74 = vmatpush1.msra.mxu0 0.0
    %75 = vmatprep.subr.mxu0 0.0
    %76 = vmatpush1.msra.mxu0 0.0
    %77 = vmatprep.subr.mxu0 0.0
    %78 = vmatpush1.msra.mxu0 0.0
    %79 = vmatprep.subr.mxu0 0.0
    %80 = vmatpush1.msra.mxu0 0.0
    %81 = vmatprep.subr.mxu0 0.0
    %82 = vmatpush1.msra.mxu0 0.0
    %83 = vmatprep.subr.mxu0 0.0
    %84 = vmatpush1.msra.mxu0 0.0
    %85 = vmatprep.subr.mxu0 0.0
    %86 = vmatpush1.msra.mxu0 0.0
    %87 = vmatprep.subr.mxu0 0.0
    %88 = vmatpush1.msra.mxu0 0.0
    %89 = vmatprep.subr.mxu0 0.0
    %90 = vmatpush1.msra.mxu0 0.0
    %91 = vmatprep.subr.mxu0 0.0
    %92 = vmatpush1.msra.mxu0 0.0
    %93 = vmatprep.subr.mxu0 0.0
    %94 = vmatpush1.msra.mxu0 0.0
    %95 = vmatprep.subr.mxu0 0.0
    %96 = vmatpush1.msra.mxu0 0.0
    %97 = vmatprep.subr.mxu0 0.0
    %98 = vmatpush1.msra.mxu0 0.0
    %99 = vmatprep.subr.mxu0 0.0
    %100 = vmatpush1.msra.mxu0 0.0
    %101 = vmatprep.subr.mxu0 0.0
    %102 = vmatpush1.msra.mxu0 0.0
    %103 = vmatprep.subr.mxu0 0.0
    %104 = vmatpush1.msra.mxu0 0.0
    %105 = vmatprep.subr.mxu0 0.0
    %106 = vmatpush1.msra.mxu0 0.0
    %107 = vmatprep.subr.mxu0 0.0
    %108 = vmatpush1.msra.mxu0 0.0
    %109 = vmatprep.subr.mxu0 0.0
    %110 = vmatpush1.msra.mxu0 0.0
    %111 = vmatprep.subr.mxu0 0.0
    %112 = vmatpush1.msra.mxu0 0.0
    %113 = vmatprep.subr.mxu0 0.0
    %114 = vmatpush1.msra.mxu0 0.0
    %115 = vmatprep.subr.mxu0 0.0
    %116 = vmatpush1.msra.mxu0 0.0
    %117 = vmatprep.subr.mxu0 0.0
    %118 = vmatpush1.msra.mxu0 0.0
    %119 = vmatprep.subr.mxu0 0.0
    %120 = vmatpush1.msra.mxu0 0.0
    %121 = vmatprep.subr.mxu0 0.0
    %122 = vmatpush1.msra.mxu0 0.0
    %123 = vmatprep.subr.mxu0 0.0
    %124 = vmatpush1.msra.mxu0 0.0
    %125 = vmatprep.subr.mxu0 0.0
    %126 = vmatpush1.msra.mxu0 0.0
    %127 = vmatprep.mubr.f32.mxu0 0.0
    %128 = vmatmul.mubr.f32.gmra.mrb[0].mxu0 %v58
    %v129 = vpop.f32.mrb[0].mxu0
    %v130 = vadd.f32 %v54, %v129
    %v131 = vpop.f32.mrb[0].mxu0
    %132 = vmatprep.mubr.f32.mxu0 0.0
    %133 = vmatmul.mubr.f32.gmra.mrb[0].mxu0 %v61
    %v134 = vpop.f32.mrb[0].mxu0
    %v135 = vadd.f32 %v54, %v134
    %v136 = vpop.f32.mrb[0].mxu0
    %137 = vdwg.mxu0
    %vm138 = vcmp.ge.f32.partialorder %v130, 0.0
    %vm139 = vcmp.ge.f32.partialorder %v135, 0.0
    %v140 = vmul.f32 %v130, 0.01
    %v141 = vmul.f32 %v135, 0.01
    %v142 = vsel %vm138, %v130, %v140
    %v143 = vsel %vm139, %v135, %v141
    %v144 = vadd.f32 %v142, %v43
    %v145 = vadd.f32 %v143, %v44
    %146 = vst.msk [vmem:[#allocation7] sm:$0xff] %vm56, %v144
    %147 = vst.msk [vmem:[#allocation7 + $0x8] sm:$0xff] %vm56, %v145
    // Predicated region
    $region22: #{tpu_custom_call.1} parent=1 // pred_check
      _
    $region23: #{tpu_custom_call.1} parent=1 // pred_check_branch
      %149 = sbr.rel (0) target = $region25
    $region24: #{tpu_custom_call.1} parent=1 // pred_region
      %s151 = ssub.s32 256, 256
      %152 = vsyncadd [#allocation4], %s151
      %s153 = sshll.u32 [#allocation7], 4
      %s154 = int_to_ptr.vmem [resolvable:$true] %s153
      %159 = dma.vmem_to_hbm [thread:$0]  %s154, 256, %s3, [#allocation4], 128, 128, 8
    $region25: #{tpu_custom_call.1} parent=1 // pred_fallthru
      _
    // Predicated region
    $region26: #{tpu_custom_call.1} parent=1 // pred_check
      _
    $region27: #{tpu_custom_call.1} parent=1 // pred_check_branch
      %161 = sbr.rel (0) target = $region29
    $region28: #{tpu_custom_call.1} parent=1 // pred_region
      %162 = dma.done [#allocation4], 256
    $region29: #{tpu_custom_call.1} parent=1 // pred_fallthru
      _
    %163 = vsyncpa [#allocation3], 1
    %164 = vsyncpa [#allocation6], 1
    %165 = vsyncpa [#allocation4], 1

</llo_original>
